<compile_context>
chip_gen: v7x
topology: tpu7x:2x2x1
jax: 0.10.0
libtpu: 0.0.40
codegen_flags: <defaults>
</compile_context>

<pallas_src>
import functools

import numpy as np
import jax
import jax.numpy as jnp
from jax import lax
from jax.experimental import pallas as pl
from jax.experimental.pallas import tpu as pltpu


def _round_up(v, m):
    return ((v + m - 1) // m) * m


def _laloss_kernel(*refs, tn, tc, n_true, gather_in_kernel):
    """Grid = (batch_tiles, class_tiles); class axis (k) streams an online logsumexp."""
    if gather_in_kernel:
        x_ref, iota_ref, tgt_ref, out_ref, m_sc, l_sc, t_sc = refs
    else:
        x_ref, iota_ref, out_ref, m_sc, l_sc = refs

    i = pl.program_id(0)                 # batch tile (parallel)
    k = pl.program_id(1)                 # class tile (streamed reduction)
    nk = pl.num_programs(1)

    @pl.when(k == 0)
    def _init():
        # -inf init is safe: the first class tile always contains at least one
        # finite logit (class padding is trailing and smaller than one tile).
        m_sc[...] = jnp.full_like(m_sc, -jnp.inf)
        l_sc[...] = jnp.zeros_like(l_sc)
        if gather_in_kernel:
            t_sc[...] = jnp.zeros_like(t_sc)

    x = x_ref[...].astype(jnp.float32)          # (tn, tc); cast on-chip
    # (1, tc) broadcast add; cheap next to the HBM stream.
    logits = x + iota_ref[...]
    # TODO(synk): if the bundle shows a per-step sublane broadcast here,
    # pre-replicate iota to (8, c_pad) in the wrapper.

    # --- online logsumexp update ---
    m_prev = m_sc[...]                                            # (tn, 1)
    m_new = jnp.maximum(m_prev, jnp.max(logits, axis=-1, keepdims=True))
    alpha = jnp.exp(m_prev - m_new)
    l_sc[...] = alpha * l_sc[...] + jnp.sum(
        jnp.exp(logits - m_new), axis=-1, keepdims=True)
    m_sc[...] = m_new

    if gather_in_kernel:
        # Trimmed target gather: compare the local target column against a
        # constant lane iota (no full-tile global-id add); VPU select + XLU
        # lane reduce, no MXU.
        tgt_local = tgt_ref[...] - k * tc                         # (tn, 1)
        lane = lax.broadcasted_iota(jnp.int32, (tn, tc), 1)       # constant-folds
        t_sc[...] = t_sc[...] + jnp.sum(
            jnp.where(lane == tgt_local, logits, 0.0), axis=-1, keepdims=True)

    @pl.when(k == nk - 1)
    def _finalize():
        lse = m_sc[...] + jnp.log(l_sc[...])                      # (tn, 1)
        per_row = lse - t_sc[...] if gather_in_kernel else lse
        row_ids = i * tn + lax.broadcasted_iota(jnp.int32, (tn, 1), 0)
        per_row = jnp.where(row_ids < n_true, per_row, 0.0)       # mask pad rows
        partial = jnp.sum(per_row)
        # Lane-dense (8, 128) output block; partial sum at [0, 0].
        r_ids = lax.broadcasted_iota(jnp.int32, (8, 128), 0)
        c_ids = lax.broadcasted_iota(jnp.int32, (8, 128), 1)
        out_ref[...] = jnp.where((r_ids == 0) & (c_ids == 0), partial, 0.0)


def laloss_pallas(x, iota_list, target, *, tn_max=512, tc_max=None,
                  gather_in_kernel=True):
    """x: (N, C) float (any dtype), iota_list: (C,), target: (N,) int -> scalar f32."""
    n, c = x.shape
    itemsize = jnp.dtype(x.dtype).itemsize
    # Sublane packing for x's dtype: 8 (32-bit), 16 (bf16), 32 (int8/fp8).
    align = max(8, 32 // itemsize)

    # --- batch tiling (parallel grid axis) ---
    tn_max = max(align, (tn_max // align) * align)
    n_al = _round_up(n, align)
    tn_cap = tn_max
    if n_al >= 2 * align:
        # Guarantee >= 2 batch tiles so both v7x TensorCores get work.
        tn_cap = min(tn_cap, _round_up(-(-n // 2), align))
    tn = min(n_al, tn_cap)
    n_pad = _round_up(n, tn)
    nbt = n_pad // tn

    # --- class tiling (streamed reduction axis, lane-dense) ---
    c128 = _round_up(c, 128)
    if tc_max is None:
        # Aim for ~8 MiB of x per grid step (>= 2-4 KiB contiguous per DMA row)
        # to amortize the ~0.35 us fixed per-step cost: 4096 f32 / 8192 bf16 at
        # tn=512. Capped so double-buffered VMEM stays well under 64 MiB (v7x).
        tc_max = ((8 * 1024 * 1024) // (tn * itemsize)) // 128 * 128
        tc_max = int(max(1024, min(tc_max, 16384)))
    else:
        tc_max = max(128, (tc_max // 128) * 128)
    tc = min(c128, tc_max)
    c_pad = _round_up(c, tc)
    nct = c_pad // tc

    # --- padding; x keeps its original dtype (no wrapper-side f32 cast) ---
    x_p = x
    if n_pad != n or c_pad != c:
        x_p = jnp.pad(x, ((0, n_pad - n), (0, c_pad - c)))
    iota_f32 = iota_list.astype(jnp.float32)
    iota_p = jnp.pad(iota_f32, (0, c_pad - c),
                     constant_values=-1e30).reshape(1, c_pad)

    kernel = functools.partial(_laloss_kernel, tn=tn, tc=tc, n_true=n,
                               gather_in_kernel=gather_in_kernel)

    in_specs = [
        pl.BlockSpec((tn, tc), lambda i, k: (i, k)),   # x tile
        pl.BlockSpec((1, tc), lambda i, k: (0, k)),    # iota tile
    ]
    inputs = [x_p, iota_p]
    scratch_shapes = [pltpu.VMEM((tn, 1), jnp.float32)] * 2        # m, l
    if gather_in_kernel:
        tgt_p = jnp.pad(target.astype(jnp.int32), (0, n_pad - n)).reshape(n_pad, 1)
        in_specs.append(pl.BlockSpec((tn, 1), lambda i, k: (i, 0)))
        inputs.append(tgt_p)
        scratch_shapes = scratch_shapes + [pltpu.VMEM((tn, 1), jnp.float32)]  # t

    # Derived VMEM budget (double-buffered x dominates); capped at 64 MiB so it
    # also fits v7x's per-TC VMEM, floor of 32 MiB (v5e scoped default is 16).
    vmem_bytes = (2 * tn * tc * itemsize + 2 * tc * 4 + 2 * tn * 4
                  + 2 * 8 * 128 * 4 + 3 * tn * 4)
    vmem_limit = int(min(max(2 * vmem_bytes, 32 * 1024 * 1024),
                         64 * 1024 * 1024))

    partials = pl.pallas_call(
        kernel,
        out_shape=jax.ShapeDtypeStruct((nbt * 8, 128), jnp.float32),
        grid_spec=pltpu.PrefetchScalarGridSpec(
            num_scalar_prefetch=0,
            grid=(nbt, nct),                         # reduction axis last
            in_specs=in_specs,
            out_specs=pl.BlockSpec((8, 128), lambda i, k: (i, 0)),
            scratch_shapes=scratch_shapes),
        compiler_params=pltpu.CompilerParams(
            dimension_semantics=("parallel", "arbitrary"),
            vmem_limit_bytes=vmem_limit),
        cost_estimate=pl.CostEstimate(
            flops=5 * n_pad * c_pad,
            transcendentals=n_pad * c_pad,
            bytes_accessed=(n_pad * c_pad * itemsize
                            + 4 * (c_pad + n_pad) + nbt * 8 * 128 * 4)),
    )(*inputs)

    total = jnp.sum(partials)
    if not gather_in_kernel:
        # Tiny N-element gather done once in the wrapper; removes ~3 full-tile
        # VALU passes + 1 XLU lane-reduce per class step from the kernel body
        # (a real win on v7x / bf16 where VALU, not HBM, binds).
        tgt_logit = (jnp.take_along_axis(
            x, target[:, None].astype(jnp.int32), axis=1)[:, 0].astype(jnp.float32)
            + iota_f32[target])
        total = total - jnp.sum(tgt_logit)
    return total / jnp.float32(n)


def laloss_reference(x, iota_list, target):
    """Pure-JAX reference of the PyTorch module forward."""
    logits = x.astype(jnp.float32) + iota_list[None, :].astype(jnp.float32)
    logp = jax.nn.log_softmax(logits, axis=-1)
    nll = -jnp.take_along_axis(logp, target[:, None], axis=-1)[:, 0]
    return jnp.mean(nll)


if __name__ == "__main__":
    # Deterministic parameter setup (mirrors LAloss.__init__).
    batch = 20            # not a tile multiple -> exercises row masking + 2 batch tiles
    num_classes = 200     # not a multiple of 128 -> exercises class padding
    tau = 1.0
    cls_num_list = [float(i + 1) for i in range(num_classes)]  # synthetic counts
    cls_probs = np.array(cls_num_list, dtype=np.float64) / sum(cls_num_list)
    iota_list = jnp.asarray((tau * np.log(cls_probs)).astype(np.float32))

    # Deterministic example inputs.
    key = jax.random.PRNGKey(0)
    kx, kt = jax.random.split(key)
    x = jax.random.normal(kx, (batch, num_classes), dtype=jnp.float32)
    target = jax.random.randint(kt, (batch,), 0, num_classes, dtype=jnp.int32)

    ref = jax.block_until_ready(laloss_reference(x, iota_list, target))

    # 1) Default (large, roofline-oriented) tiles; in-kernel target gather.
    l1 = jax.block_until_ready(laloss_pallas(x, iota_list, target))
    assert np.allclose(np.asarray(l1), np.asarray(ref), rtol=1e-5, atol=1e-5), (
        float(l1), float(ref))

    # 2) Small tiles (correctness-only, NOT for benchmarking): exercises the
    #    streamed class axis (2 tiles), 2 batch tiles, padded rows/cols and the
    #    wrapper-side target gather.
    l2 = jax.block_until_ready(
        laloss_pallas(x, iota_list, target, tn_max=16, tc_max=128,
                      gather_in_kernel=False))
    assert np.allclose(np.asarray(l2), np.asarray(ref), rtol=1e-5, atol=1e-5), (
        float(l2), float(ref))

    # 3) bf16 activations (halves HBM traffic; exercises tn alignment of 16).
    x_bf16 = x.astype(jnp.bfloat16)
    ref_bf16 = jax.block_until_ready(laloss_reference(x_bf16, iota_list, target))
    l3 = jax.block_until_ready(laloss_pallas(x_bf16, iota_list, target))
    assert np.allclose(np.asarray(l3), np.asarray(ref_bf16),
                       rtol=1e-5, atol=1e-5), (float(l3), float(ref_bf16))

    print("KERNEL_OK")
</pallas_src>

<mosaic_0001>
module attributes {stable_mosaic.version = 11 : i64} {
  func.func @_laloss_kernel(%arg0: i32, %arg1: i32, %arg2: memref<16x256xf32, #tpu.memory_space<vmem>>, %arg3: memref<1x256xf32, #tpu.memory_space<vmem>>, %arg4: memref<16x1xi32, #tpu.memory_space<vmem>>, %arg5: memref<8x128xf32, #tpu.memory_space<vmem>>, %arg6: memref<16x1xf32, #tpu.memory_space<vmem>>, %arg7: memref<16x1xf32, #tpu.memory_space<vmem>>, %arg8: memref<16x1xf32, #tpu.memory_space<vmem>>) attributes {dimension_semantics = [#tpu.dimension_semantics<parallel>, #tpu.dimension_semantics<arbitrary>], iteration_bounds = array<i64: 2, 1>, scalar_prefetch = 0 : i64, scratch_operands = 3 : i64, tpu.core_type = #tpu.core_type<tc>, window_params = [{transform_indices = @transform_0, window_bounds = array<i64: 16, 256>}, {transform_indices = @transform_1, window_bounds = array<i64: 1, 256>}, {transform_indices = @transform_2, window_bounds = array<i64: 16, 1>}, {transform_indices = @transform_3, window_bounds = array<i64: 8, 128>}]} {
    %c0_i32 = arith.constant 0 : i32
    %0 = arith.cmpi eq, %arg1, %c0_i32 : i32
    %1 = arith.extui %0 : i1 to i32
    %c0_i32_0 = arith.constant 0 : i32
    %2 = arith.cmpi ne, %1, %c0_i32_0 : i32
    scf.if %2 {
      %cst_23 = arith.constant 0xFF800000 : f32
      %40 = vector.broadcast %cst_23 : f32 to vector<16x1xf32>
      %c0_24 = arith.constant 0 : index
      %c0_25 = arith.constant 0 : index
      %41 = vector.load %arg6[%c0_24, %c0_25] : memref<16x1xf32, #tpu.memory_space<vmem>>, vector<16x1xf32>
      tpu.vector_store %arg6[%c0_24, %c0_25], %40 {strides = array<i32>} : memref<16x1xf32, #tpu.memory_space<vmem>>, vector<16x1xf32>,
      %cst_26 = arith.constant 0.000000e+00 : f32
      %42 = vector.broadcast %cst_26 : f32 to vector<16x1xf32>
      %c0_27 = arith.constant 0 : index
      %c0_28 = arith.constant 0 : index
      %43 = vector.load %arg7[%c0_27, %c0_28] : memref<16x1xf32, #tpu.memory_space<vmem>>, vector<16x1xf32>
      tpu.vector_store %arg7[%c0_27, %c0_28], %42 {strides = array<i32>} : memref<16x1xf32, #tpu.memory_space<vmem>>, vector<16x1xf32>,
      %cst_29 = arith.constant 0.000000e+00 : f32
      %44 = vector.broadcast %cst_29 : f32 to vector<16x1xf32>
      %c0_30 = arith.constant 0 : index
      %c0_31 = arith.constant 0 : index
      %45 = vector.load %arg8[%c0_30, %c0_31] : memref<16x1xf32, #tpu.memory_space<vmem>>, vector<16x1xf32>
      tpu.vector_store %arg8[%c0_30, %c0_31], %44 {strides = array<i32>} : memref<16x1xf32, #tpu.memory_space<vmem>>, vector<16x1xf32>,
    } else {
    }
    %c0 = arith.constant 0 : index
    %c0_1 = arith.constant 0 : index
    %3 = vector.load %arg2[%c0, %c0_1] : memref<16x256xf32, #tpu.memory_space<vmem>>, vector<16x256xf32>
    %c0_2 = arith.constant 0 : index
    %c0_3 = arith.constant 0 : index
    %4 = vector.load %arg3[%c0_2, %c0_3] : memref<1x256xf32, #tpu.memory_space<vmem>>, vector<1x256xf32>
    %5 = vector.broadcast %4 : vector<1x256xf32> to vector<16x256xf32>
    %6 = arith.addf %3, %5 : vector<16x256xf32>
    %c0_4 = arith.constant 0 : index
    %c0_5 = arith.constant 0 : index
    %7 = vector.load %arg6[%c0_4, %c0_5] : memref<16x1xf32, #tpu.memory_space<vmem>>, vector<16x1xf32>
    %cst = arith.constant dense<0xFF800000> : vector<16xf32>
    %8 = vector.multi_reduction <maximumf>, %6, %cst [1] : vector<16x256xf32> to vector<16xf32>
    %9 = vector.shape_cast %8 : vector<16xf32> to vector<16x1xf32>
    %10 = arith.maximumf %7, %9 : vector<16x1xf32>
    %11 = arith.subf %7, %10 : vector<16x1xf32>
    %12 = math.exp %11 : vector<16x1xf32>
    %c0_6 = arith.constant 0 : index
    %c0_7 = arith.constant 0 : index
    %13 = vector.load %arg7[%c0_6, %c0_7] : memref<16x1xf32, #tpu.memory_space<vmem>>, vector<16x1xf32>
    %14 = arith.mulf %12, %13 : vector<16x1xf32>
    %15 = vector.broadcast %10 : vector<16x1xf32> to vector<16x256xf32>
    %16 = arith.subf %6, %15 : vector<16x256xf32>
    %17 = math.exp %16 : vector<16x256xf32>
    %cst_8 = arith.constant dense<0.000000e+00> : vector<16xf32>
    %18 = vector.multi_reduction <add>, %17, %cst_8 [1] : vector<16x256xf32> to vector<16xf32>
    %19 = vector.shape_cast %18 : vector<16xf32> to vector<16x1xf32>
    %20 = arith.addf %14, %19 : vector<16x1xf32>
    %c0_9 = arith.constant 0 : index
    %c0_10 = arith.constant 0 : index
    %21 = vector.load %arg7[%c0_9, %c0_10] : memref<16x1xf32, #tpu.memory_space<vmem>>, vector<16x1xf32>
    tpu.vector_store %arg7[%c0_9, %c0_10], %20 {strides = array<i32>} : memref<16x1xf32, #tpu.memory_space<vmem>>, vector<16x1xf32>,
    %c0_11 = arith.constant 0 : index
    %c0_12 = arith.constant 0 : index
    %22 = vector.load %arg6[%c0_11, %c0_12] : memref<16x1xf32, #tpu.memory_space<vmem>>, vector<16x1xf32>
    tpu.vector_store %arg6[%c0_11, %c0_12], %10 {strides = array<i32>} : memref<16x1xf32, #tpu.memory_space<vmem>>, vector<16x1xf32>,
    %c0_13 = arith.constant 0 : index
    %c0_14 = arith.constant 0 : index
    %23 = vector.load %arg4[%c0_13, %c0_14] : memref<16x1xi32, #tpu.memory_space<vmem>>, vector<16x1xi32>
    %c256_i32 = arith.constant 256 : i32
    %24 = arith.muli %arg1, %c256_i32 : i32
    %25 = vector.broadcast %24 : i32 to vector<16x1xi32>
    %26 = arith.subi %23, %25 : vector<16x1xi32>
    %27 = tpu.iota {dimensions = array<i32: 1>} : vector<16x256xi32>
    %c0_15 = arith.constant 0 : index
    %c0_16 = arith.constant 0 : index
    %28 = vector.load %arg8[%c0_15, %c0_16] : memref<16x1xf32, #tpu.memory_space<vmem>>, vector<16x1xf32>
    %29 = vector.broadcast %26 : vector<16x1xi32> to vector<16x256xi32>
    %30 = arith.cmpi eq, %27, %29 : vector<16x256xi32>
    %cst_17 = arith.constant 0.000000e+00 : f32
    %31 = vector.broadcast %cst_17 : f32 to vector<16x256xf32>
    %32 = arith.select %30, %6, %31 : vector<16x256xi1>, vector<16x256xf32>
    %cst_18 = arith.constant dense<0.000000e+00> : vector<16xf32>
    %33 = vector.multi_reduction <add>, %32, %cst_18 [1] : vector<16x256xf32> to vector<16xf32>
    %34 = vector.shape_cast %33 : vector<16xf32> to vector<16x1xf32>
    %35 = arith.addf %28, %34 : vector<16x1xf32>
    %c0_19 = arith.constant 0 : index
    %c0_20 = arith.constant 0 : index
    %36 = vector.load %arg8[%c0_19, %c0_20] : memref<16x1xf32, #tpu.memory_space<vmem>>, vector<16x1xf32>
    tpu.vector_store %arg8[%c0_19, %c0_20], %35 {strides = array<i32>} : memref<16x1xf32, #tpu.memory_space<vmem>>, vector<16x1xf32>,
    %c0_i32_21 = arith.constant 0 : i32
    %37 = arith.cmpi eq, %arg1, %c0_i32_21 : i32
    %38 = arith.extui %37 : i1 to i32
    %c0_i32_22 = arith.constant 0 : i32
    %39 = arith.cmpi ne, %38, %c0_i32_22 : i32
    scf.if %39 {
      %c0_23 = arith.constant 0 : index
      %c0_24 = arith.constant 0 : index
      %40 = vector.load %arg6[%c0_23, %c0_24] : memref<16x1xf32, #tpu.memory_space<vmem>>, vector<16x1xf32>
      %c0_25 = arith.constant 0 : index
      %c0_26 = arith.constant 0 : index
      %41 = vector.load %arg7[%c0_25, %c0_26] : memref<16x1xf32, #tpu.memory_space<vmem>>, vector<16x1xf32>
      %42 = math.log %41 : vector<16x1xf32>
      %43 = arith.addf %40, %42 : vector<16x1xf32>
      %c0_27 = arith.constant 0 : index
      %c0_28 = arith.constant 0 : index
      %44 = vector.load %arg8[%c0_27, %c0_28] : memref<16x1xf32, #tpu.memory_space<vmem>>, vector<16x1xf32>
      %45 = arith.subf %43, %44 : vector<16x1xf32>
      %c16_i32 = arith.constant 16 : i32
      %46 = arith.muli %arg0, %c16_i32 : i32
      %47 = tpu.iota {dimensions = array<i32: 0>} : vector<16x1xi32>
      %48 = vector.broadcast %46 : i32 to vector<16x1xi32>
      %49 = arith.addi %48, %47 : vector<16x1xi32>
      %c20_i32 = arith.constant 20 : i32
      %50 = vector.broadcast %c20_i32 : i32 to vector<16x1xi32>
      %51 = arith.cmpi slt, %49, %50 : vector<16x1xi32>
      %cst_29 = arith.constant 0.000000e+00 : f32
      %52 = vector.broadcast %cst_29 : f32 to vector<16x1xf32>
      %53 = arith.select %51, %45, %52 : vector<16x1xi1>, vector<16x1xf32>
      %54 = vector.shape_cast %53 : vector<16x1xf32> to vector<1x16x1xf32>
      %cst_30 = arith.constant dense<0.000000e+00> : vector<1xf32>
      %55 = vector.multi_reduction <add>, %54, %cst_30 [1, 2] : vector<1x16x1xf32> to vector<1xf32>
      %56 = vector.shape_cast %55 : vector<1xf32> to vector<1x1x1xf32>
      %57 = vector.extract %56[0, 0, 0] : f32 from vector<1x1x1xf32>
      %58 = tpu.iota {dimensions = array<i32: 0>} : vector<8x128xi32>
      %59 = tpu.iota {dimensions = array<i32: 1>} : vector<8x128xi32>
      %c0_i32_31 = arith.constant 0 : i32
      %60 = vector.broadcast %c0_i32_31 : i32 to vector<8x128xi32>
      %61 = arith.cmpi eq, %58, %60 : vector<8x128xi32>
      %c0_i32_32 = arith.constant 0 : i32
      %62 = vector.broadcast %c0_i32_32 : i32 to vector<8x128xi32>
      %63 = arith.cmpi eq, %59, %62 : vector<8x128xi32>
      %64 = arith.andi %61, %63 : vector<8x128xi1>
      %cst_33 = arith.constant 0.000000e+00 : f32
      %65 = vector.broadcast %57 : f32 to vector<8x128xf32>
      %66 = vector.broadcast %cst_33 : f32 to vector<8x128xf32>
      %67 = arith.select %64, %65, %66 : vector<8x128xi1>, vector<8x128xf32>
      %c0_34 = arith.constant 0 : index
      %c0_35 = arith.constant 0 : index
      %68 = vector.load %arg5[%c0_34, %c0_35] : memref<8x128xf32, #tpu.memory_space<vmem>>, vector<8x128xf32>
      tpu.vector_store %arg5[%c0_34, %c0_35], %67 {strides = array<i32>} : memref<8x128xf32, #tpu.memory_space<vmem>>, vector<8x128xf32>,
    } else {
    }
    return
  }
  func.func @transform_0(%arg0: i32, %arg1: i32) -> (i32, i32) {
    %c0_i32 = arith.constant 0 : i32
    return %arg0, %arg1 : i32, i32
  }
  func.func @transform_1(%arg0: i32, %arg1: i32) -> (i32, i32) {
    %c0_i32 = arith.constant 0 : i32
    %c0_i32_0 = arith.constant 0 : i32
    return %c0_i32, %arg1 : i32, i32
  }
  func.func @transform_2(%arg0: i32, %arg1: i32) -> (i32, i32) {
    %c0_i32 = arith.constant 0 : i32
    %c0_i32_0 = arith.constant 0 : i32
    return %arg0, %c0_i32 : i32, i32
  }
  func.func @transform_3(%arg0: i32, %arg1: i32) -> (i32, i32) {
    %c0_i32 = arith.constant 0 : i32
    %c0_i32_0 = arith.constant 0 : i32
    return %arg0, %c0_i32 : i32, i32
  }
}

</mosaic_0001>

<llo_original>
// kernel: tpu_custom_call.1
$region0: #{tpu_custom_call.1}
  #allocation0 [shape = 'u32[]', space=smem, size = 0x4, offset = 0x4, fixed_abs, tag = 'smem constant byte address 0x4 - core index']
  #allocation1 [shape = 'u32[144,128]{1,0:T(1,128)}', space=vmem, size = 0x12000, scoped, tag = 'internal scratch']
  #allocation2 [shape = 'f32[16,1]{1,0:T(8,128)}', space=vmem, size = 0x2000, scoped, tag = 'scratch operand']
  #allocation3 [shape = 'f32[16,1]{1,0:T(8,128)}', space=vmem, size = 0x2000, scoped, tag = 'scratch operand']
  #allocation4 [shape = 'f32[16,1]{1,0:T(8,128)}', space=vmem, size = 0x2000, scoped, tag = 'scratch operand']
  %s0 = inlined_call_operand.hbm [shape: f32[32,256], index: 0, kind: input, shape index: {}]
  %s1 = inlined_call_operand.vmem [shape: f32[1,256], index: 1, kind: input, shape index: {}]
  %s2 = inlined_call_operand.vmem [shape: s32[32,1], index: 2, kind: input, shape index: {}]
  %s3 = inlined_call_operand.hbm [shape: f32[16,128], index: 3, kind: output, shape index: {}]
  %s4 = sld [smem:[#allocation0]]
  $region57: #{tpu_custom_call.1} parent=0
    _
  %s6 = ssub.s32 1, %s4
  %s7 = scalar_select 0, %s6, %s4
  $region1: #{tpu_custom_call.1} parent=0
    #allocation5 [shape = 'u8[32768]{0}', space=vmem, size = 0x8000, scoped, tag = 'input window, operand 0']
    #allocation6 [shape = 's32[2]{0}', space=sflag, size = 0x8, scoped, tag = 'scoped memory for tpu_custom_call.1']
    #allocation7 [shape = 's32[2]{0}', space=sflag, size = 0x8, scoped, tag = 'scoped memory for tpu_custom_call.1']
    #allocation8 [shape = 'u8[8192]{0}', space=vmem, size = 0x2000, scoped, tag = 'output window, operand 0']
    %8 = vsyncpa [#allocation6], 0
    %s9 = scalar_lea.sflag [#allocation6], 1
    %10 = vsyncpa %s9, 0
    %11 = vsyncpa [#allocation7], 0
    %s12 = scalar_lea.sflag [#allocation7], 1
    %13 = vsyncpa %s12, 0
    loop: start=0, step=1, limit=4
    $region2: #{tpu_custom_call.1} parent=1 // loop_pre_header
      _
    $region3: #{tpu_custom_call.1} parent=1 // loop_header
      %s15 = sphi 0, %s19
      %p16 = scmp.ge.s32.totalorder %s15, 4
      %s22 = sphi 0, %s34
      %s23 = sphi 0, %s30
      %s24 = sphi 0, %s22
      %s25 = sphi 0, %s23
      %s26 = sphi 0, %s24
      %s27 = sphi 0, %s25
      %s39 = sphi 0, %s41
      %s42 = sphi 0, %s39
      %s43 = sphi 0, %s42
      %s59 = sphi 0, %s43
      %s65 = sphi 0, %s67
      %s68 = sphi 0, %s65
      %s69 = sphi 0, %s68
      %s85 = sphi 0, %s69
      %s91 = sphi 0, %s93
      %s94 = sphi 0, %s91
      %s95 = sphi 0, %s94
      %s111 = sphi 0, %s95
      %s117 = sphi 0, %s119
      %s120 = sphi 0, %s117
      %s121 = sphi 0, %s120
      %s137 = sphi 0, %s121
    $region4: #{tpu_custom_call.1} parent=1 // loop_header_branch
      %18 = sbr.rel (%p16) target = $region8
    $region5: #{tpu_custom_call.1} parent=1 // loop_body
      %s20 = ssub.s32 %s15, 1
      %s21 = ssub.s32 %s15, 2
      %s28 = sadd.s32 1, %s23
      %p29 = scmp.ge.s32.totalorder %s28, 1
      %s30 = scalar_select %p29, 0, %s28
      %s31 = sadd.s32 1, %s22
      %s32 = scalar_select %p29, %s31, %s22
      %p33 = scmp.ge.s32.totalorder %s32, 2
      %s34 = scalar_select %p33, 0, %s32
      %s35 = ssub.s32 %s22, %s34
      %s36 = ssub.s32 %s23, %s30
      %s37 = sor.u32 %s35, %s36
      %p38 = scmp.eq.s32.totalorder %s37, 0
      %s40 = sadd.s32 %s39, 1
      %s41 = scalar_select %p38, %s39, %s40
      %p44 = pneg %p38
      %p45 = scmp.eq.s32.totalorder %s15, 1
      %p46 = por %p44, %p45
      %p47 = scmp.ne.s32.totalorder %s39, %s42
      %p48 = scmp.eq.s32.totalorder %s15, 0
      %p49 = por %p47, %p48
      %p50 = scmp.ne.s32.totalorder %s39, %s42
      %p51 = scmp.eq.s32.totalorder %s20, 1
      %p52 = por %p50, %p51
      %p53 = scmp.ne.s32.totalorder %s42, %s43
      %p54 = scmp.eq.s32.totalorder %s20, 0
      %p55 = por %p53, %p54
      %p56 = scmp.ne.s32.totalorder %s42, %s43
      %p57 = scmp.eq.s32.totalorder %s21, 1
      %p58 = por %p56, %p57
      %p60 = scmp.ne.s32.totalorder %s43, %s59
      %p61 = scmp.eq.s32.totalorder %s21, 0
      %p62 = por %p60, %p61
      %s63 = ssub.s32 %s23, %s30
      %p64 = scmp.eq.s32.totalorder %s63, 0
      %s66 = sadd.s32 %s65, 1
      %s67 = scalar_select %p64, %s65, %s66
      %p70 = pneg %p64
      %p71 = scmp.eq.s32.totalorder %s15, 1
      %p72 = por %p70, %p71
      %p73 = scmp.ne.s32.totalorder %s65, %s68
      %p74 = scmp.eq.s32.totalorder %s15, 0
      %p75 = por %p73, %p74
      %p76 = scmp.ne.s32.totalorder %s65, %s68
      %p77 = scmp.eq.s32.totalorder %s20, 1
      %p78 = por %p76, %p77
      %p79 = scmp.ne.s32.totalorder %s68, %s69
      %p80 = scmp.eq.s32.totalorder %s20, 0
      %p81 = por %p79, %p80
      %p82 = scmp.ne.s32.totalorder %s68, %s69
      %p83 = scmp.eq.s32.totalorder %s21, 1
      %p84 = por %p82, %p83
      %p86 = scmp.ne.s32.totalorder %s69, %s85
      %p87 = scmp.eq.s32.totalorder %s21, 0
      %p88 = por %p86, %p87
      %s89 = ssub.s32 %s22, %s34
      %p90 = scmp.eq.s32.totalorder %s89, 0
      %s92 = sadd.s32 %s91, 1
      %s93 = scalar_select %p90, %s91, %s92
      %p96 = pneg %p90
      %p97 = scmp.eq.s32.totalorder %s15, 1
      %p98 = por %p96, %p97
      %p99 = scmp.ne.s32.totalorder %s91, %s94
      %p100 = scmp.eq.s32.totalorder %s15, 0
      %p101 = por %p99, %p100
      %p102 = scmp.ne.s32.totalorder %s91, %s94
      %p103 = scmp.eq.s32.totalorder %s20, 1
      %p104 = por %p102, %p103
      %p105 = scmp.ne.s32.totalorder %s94, %s95
      %p106 = scmp.eq.s32.totalorder %s20, 0
      %p107 = por %p105, %p106
      %p108 = scmp.ne.s32.totalorder %s94, %s95
      %p109 = scmp.eq.s32.totalorder %s21, 1
      %p110 = por %p108, %p109
      %p112 = scmp.ne.s32.totalorder %s95, %s111
      %p113 = scmp.eq.s32.totalorder %s21, 0
      %p114 = por %p112, %p113
      %s115 = ssub.s32 %s22, %s34
      %p116 = scmp.eq.s32.totalorder %s115, 0
      %s118 = sadd.s32 %s117, 1
      %s119 = scalar_select %p116, %s117, %s118
      %p122 = pneg %p116
      %p123 = scmp.eq.s32.totalorder %s15, 1
      %p124 = por %p122, %p123
      %p125 = scmp.ne.s32.totalorder %s117, %s120
      %p126 = scmp.eq.s32.totalorder %s15, 0
      %p127 = por %p125, %p126
      %p128 = scmp.ne.s32.totalorder %s117, %s120
      %p129 = scmp.eq.s32.totalorder %s20, 1
      %p130 = por %p128, %p129
      %p131 = scmp.ne.s32.totalorder %s120, %s121
      %p132 = scmp.eq.s32.totalorder %s20, 0
      %p133 = por %p131, %p132
      %p134 = scmp.ne.s32.totalorder %s120, %s121
      %p135 = scmp.eq.s32.totalorder %s21, 1
      %p136 = por %p134, %p135
      %p138 = scmp.ne.s32.totalorder %s121, %s137
      %p139 = scmp.eq.s32.totalorder %s21, 0
      %p140 = por %p138, %p139
      %p141 = scmp.le.s32.totalorder 1, %s15
      %p142 = scmp.lt.s32.totalorder %s15, 3
      %p143 = pnand %p141, %p142
      %p144 = pneg %p143
      // Predicated region
      $region9: #{tpu_custom_call.1} parent=5 // pred_check
        _
      $region10: #{tpu_custom_call.1} parent=5 // pred_check_branch
        %146 = sbr.rel (%p143) target = $region12
      $region11: #{tpu_custom_call.1} parent=5 // pred_region
        %s147 = ssub.s32 %s15, 1
        // Predicated region
        $region13: #{tpu_custom_call.1} parent=11 // pred_check
          %p148 = pneg %p81
        $region14: #{tpu_custom_call.1} parent=11 // pred_check_branch
          %150 = sbr.rel (%p148) target = $region16
        $region15: #{tpu_custom_call.1} parent=11 // pred_region
          %s151 = smul.u32 2, %s25
          %p152 = scmp.lt.s32.totalorder %s151, 1
          %s153 = scalar_select %p152, %s151, 1
          %s154 = scalar_lea.vmem %s1, %s153
          %s155 = smul.u32 2, %s25
        $region16: #{tpu_custom_call.1} parent=11 // pred_fallthru
          _
      $region12: #{tpu_custom_call.1} parent=5 // pred_fallthru
        _
      %p156 = scmp.lt.s32.totalorder %s15, 2
      // Predicated region
      $region17: #{tpu_custom_call.1} parent=5 // pred_check
        %p157 = pneg %p156
      $region18: #{tpu_custom_call.1} parent=5 // pred_check_branch
        %159 = sbr.rel (%p157) target = $region20
      $region19: #{tpu_custom_call.1} parent=5 // pred_region
        // Predicated region
        $region21: #{tpu_custom_call.1} parent=19 // pred_check
          %p160 = pneg %p49
        $region22: #{tpu_custom_call.1} parent=19 // pred_check_branch
          %162 = sbr.rel (%p160) target = $region24
        $region23: #{tpu_custom_call.1} parent=19 // pred_region
          %s163 = sand.u32 %s39, 1
          %s164 = scalar_lea.sflag [#allocation6], %s163
          %s165 = sand.u32 %s39, 1
          %s166 = smul.addr %s165, 32
          %s167 = scalar_lea.vmem [#allocation5], %s166
          %s168 = smul.u32 2, %s22
          %s169 = smul.u32 2, %s23
          %s171 = ssub.s32 512, 512
          %172 = vsyncadd %s164, %s171
          %s173 = smul.addr %s168, 2
          %s174 = sadd.s32 %s169, %s173
          %s175 = smul.addr %s174, 128
          %s176 = scalar_lea.hbm %s0, %s175
          %s177 = sshll.u32 %s167, 4
          %s178 = int_to_ptr.vmem [resolvable:$true] %s177
          %183 = dma.hbm_to_vmem [thread:$0]  %s176, 512, %s178, %s164, 256, 256, 16
        $region24: #{tpu_custom_call.1} parent=19 // pred_fallthru
          _
        // Predicated region
        $region25: #{tpu_custom_call.1} parent=19 // pred_check
          %p184 = pneg %p101
        $region26: #{tpu_custom_call.1} parent=19 // pred_check_branch
          %186 = sbr.rel (%p184) target = $region28
        $region27: #{tpu_custom_call.1} parent=19 // pred_region
          %s187 = smul.u32 2, %s22
          %p188 = scmp.lt.s32.totalorder %s187, 3
          %s189 = scalar_select %p188, %s187, 3
          %s190 = smul.addr %s189, 8
          %s191 = scalar_lea.vmem %s2, %s190
          %s192 = smul.u32 2, %s22
        $region28: #{tpu_custom_call.1} parent=19 // pred_fallthru
          _
      $region20: #{tpu_custom_call.1} parent=5 // pred_fallthru
        _
      %p193 = scmp.le.s32.totalorder 1, %s15
      %p194 = scmp.lt.s32.totalorder %s15, 3
      %p195 = pnand %p193, %p194
      %p196 = pneg %p195
      // Predicated region
      $region29: #{tpu_custom_call.1} parent=5 // pred_check
        _
      $region30: #{tpu_custom_call.1} parent=5 // pred_check_branch
        %198 = sbr.rel (%p195) target = $region32
      $region31: #{tpu_custom_call.1} parent=5 // pred_region
        %s199 = ssub.s32 %s15, 1
        %s200 = sand.u32 %s42, 1
        %s201 = scalar_lea.sflag [#allocation6], %s200
        %s202 = sand.u32 %s42, 1
        %s203 = smul.addr %s202, 32
        %s204 = scalar_lea.vmem [#allocation5], %s203
        // Predicated region
        $region33: #{tpu_custom_call.1} parent=31 // pred_check
          %p205 = pneg %p55
        $region34: #{tpu_custom_call.1} parent=31 // pred_check_branch
          %207 = sbr.rel (%p205) target = $region36
        $region35: #{tpu_custom_call.1} parent=31 // pred_region
          %208 = dma.done %s201, 512
        $region36: #{tpu_custom_call.1} parent=31 // pred_fallthru
          _
        %s209 = sand.u32 %s42, 1
        %s210 = scalar_lea.sflag [#allocation6], %s209
        %s211 = sand.u32 %s42, 1
        %s212 = smul.addr %s211, 32
        %s213 = scalar_lea.vmem [#allocation5], %s212
        %p214 = pneg %p55
        %p215 = pneg %p52
        %s216 = smul.u32 2, %s25
        %p217 = scmp.lt.s32.totalorder %s216, 1
        %s218 = scalar_select %p217, %s216, 1
        %s219 = scalar_lea.vmem %s1, %s218
        %p220 = pneg %p81
        %p221 = pneg %p78
        %s222 = smul.u32 2, %s24
        %p223 = scmp.lt.s32.totalorder %s222, 3
        %s224 = scalar_select %p223, %s222, 3
        %s225 = smul.addr %s224, 8
        %s226 = scalar_lea.vmem %s2, %s225
        %p227 = pneg %p107
        %p228 = pneg %p104
        %p229 = pneg %p133
        %p230 = pneg %p130
        %s231 = sand.u32 %s120, 1
        %s232 = scalar_lea.sflag [#allocation7], %s231
        %s233 = sand.u32 %s120, 1
        %s234 = smul.addr %s233, 8
        %s235 = scalar_lea.vmem [#allocation8], %s234
        %s236 = smul.u32 2, %s24
        %s237 = smul.u32 2, %s25
        %s238 = smul.u32 2, %s25
        %p239 = scmp.lt.s32.totalorder %s238, 1
        %s240 = scalar_select %p239, %s238, 1
        %s241 = scalar_lea.vmem %s1, %s240
        %s242 = smul.u32 2, %s25
        %s243 = smul.u32 2, %s24
        %p244 = scmp.lt.s32.totalorder %s243, 3
        %s245 = scalar_select %p244, %s243, 3
        %s246 = smul.addr %s245, 8
        %s247 = scalar_lea.vmem %s2, %s246
        %s248 = smul.u32 2, %s24
        %p249 = scmp.eq.s32.totalorder %s25, 0
        // Predicated region
        $region37: #{tpu_custom_call.1} parent=31 // pred_check
          %p250 = pneg %p249
        $region38: #{tpu_custom_call.1} parent=31 // pred_check_branch
          %252 = sbr.rel (%p250) target = $region40
        $region39: #{tpu_custom_call.1} parent=31 // pred_region
          %vm253 = vcmask 7168
          %254 = vst.msk [vmem:[#allocation2] sm:$0xff] %vm253, -inf
          %255 = vst.msk [vmem:[#allocation2 + $0x8] sm:$0xff] %vm253, -inf
          %256 = vst.msk [vmem:[#allocation3] sm:$0xff] %vm253, 0.0
          %257 = vst.msk [vmem:[#allocation3 + $0x8] sm:$0xff] %vm253, 0.0
          %258 = vst.msk [vmem:[#allocation4] sm:$0xff] %vm253, 0.0
          %259 = vst.msk [vmem:[#allocation4 + $0x8] sm:$0xff] %vm253, 0.0
        $region40: #{tpu_custom_call.1} parent=31 // pred_fallthru
          _
        %v260 = vld [vmem:[%s204] sm:$0xff]
        %v261 = vld [vmem:[%s204 + $0x8] sm:$0xff]
        %v262 = vld [vmem:[%s204 + $0x10] sm:$0xff]
        %v263 = vld [vmem:[%s204 + $0x18] sm:$0xff]
        %v264 = vld [vmem:[%s241] sm:$0x3]
        %v266 = vlaneseq
        %v267 = vshrl.u32 %v266, 7
        %v268 = vsub.s32 0, %v267
        %v269 = vrot.slane %v264, %v268
        %v270 = vlaneseq
        %v271 = vshrl.u32 %v270, 7
        %v272 = vsub.s32 1, %v271
        %v273 = vrot.slane %v264, %v272
        %v276 = vadd.f32 %v260, %v269
        %v277 = vadd.f32 %v261, %v273
        %v278 = vadd.f32 %v262, %v269
        %v279 = vadd.f32 %v263, %v273
        %v280 = vld [vmem:[#allocation2] sm:$0xff]
        %v281 = vld [vmem:[#allocation2 + $0x8] sm:$0xff]
        %v282 = vmax.f32 %v276, %v277
        %283 = vmax.xlane.f32.xlu0 %v282
        %v284 = vpop.xlane.xlu0 %283
        %v285 = vmax.f32 %v278, %v279
        %286 = vmax.xlane.f32.xlu0 %v285
        %v287 = vpop.xlane.xlu0 %286
        %v288 = vmax.f32 %v280, %v284
        %v289 = vmax.f32 %v281, %v287
        %v290 = vsub.f32 %v280, %v288
        %v291 = vsub.f32 %v281, %v289
        %v292 = vmul.f32 %v290, 1.442695
        %v293 = vpow.pop %v292
        %v294 = vmul.f32 %v291, 1.442695
        %v295 = vpow.pop %v294
        %v296 = vld [vmem:[#allocation3] sm:$0xff]
        %v297 = vld [vmem:[#allocation3 + $0x8] sm:$0xff]
        %v298 = vmul.f32 %v293, %v296
        %v299 = vmul.f32 %v295, %v297
        %301 = vset.pattern.permute.xlu0 0
        %302 = vperm.xlu0 %301, %v288
        %v303 = vpop.permute.xlu0 %302
        %306 = vset.pattern.permute.xlu0 0
        %307 = vperm.xlu0 %306, %v289
        %v308 = vpop.permute.xlu0 %307
        %v310 = vsub.f32 %v276, %v303
        %v311 = vsub.f32 %v277, %v303
        %v312 = vsub.f32 %v278, %v308
        %v313 = vsub.f32 %v279, %v308
        %v314 = vmul.f32 %v310, 1.442695
        %v315 = vpow.pop %v314
        %v316 = vmul.f32 %v311, 1.442695
        %v317 = vpow.pop %v316
        %v318 = vmul.f32 %v312, 1.442695
        %v319 = vpow.pop %v318
        %v320 = vmul.f32 %v313, 1.442695
        %v321 = vpow.pop %v320
        %v322 = vadd.f32 %v315, %v317
        %323 = vadd.xlane.f32.xlu0 %v322
        %v324 = vpop.xlane.xlu0 %323
        %v325 = vadd.f32 %v319, %v321
        %326 = vadd.xlane.f32.xlu0 %v325
        %v327 = vpop.xlane.xlu0 %326
        %v328 = vadd.f32 %v298, %v324
        %v329 = vadd.f32 %v299, %v327
        %vm330 = vcmask 7168
        %331 = vst.msk [vmem:[#allocation3] sm:$0xff] %vm330, %v328
        %332 = vst.msk [vmem:[#allocation3 + $0x8] sm:$0xff] %vm330, %v329
        %333 = vst.msk [vmem:[#allocation2] sm:$0xff] %vm330, %v288
        %334 = vst.msk [vmem:[#allocation2 + $0x8] sm:$0xff] %vm330, %v289
        %v335 = vld [vmem:[%s247] sm:$0xff]
        %v336 = vld [vmem:[%s247 + $0x8] sm:$0xff]
        %s337 = smul.u32 %s25, 256
        %v338 = vstv %s337
        %v339 = vsub.s32 %v335, %v338
        %v340 = vsub.s32 %v336, %v338
        %v341 = vlaneseq
        %v342 = vand.u32 %v341, 127
        %v343 = vadd.s32 %v342, 128
        %v344 = vld [vmem:[#allocation4] sm:$0xff]
        %v345 = vld [vmem:[#allocation4 + $0x8] sm:$0xff]
        %346 = vset.pattern.permute.xlu0 0
        %347 = vperm.xlu0 %346, %v339
        %v348 = vpop.permute.xlu0 %347
        %349 = vset.pattern.permute.xlu0 0
        %350 = vperm.xlu0 %349, %v340
        %v351 = vpop.permute.xlu0 %350
        %vm352 = vcmp.eq.s32.totalorder %v342, %v348
        %vm353 = vcmp.eq.s32.totalorder %v343, %v348
        %vm354 = vcmp.eq.s32.totalorder %v342, %v351
        %vm355 = vcmp.eq.s32.totalorder %v343, %v351
        %v356 = vsel %vm352, %v276, 0.0
        %v357 = vsel %vm353, %v277, 0.0
        %v358 = vsel %vm354, %v278, 0.0
        %v359 = vsel %vm355, %v279, 0.0
        %v360 = vadd.f32 %v356, %v357
        %361 = vadd.xlane.f32.xlu0 %v360
        %v362 = vpop.xlane.xlu0 %361
        %v363 = vadd.f32 %v358, %v359
        %364 = vadd.xlane.f32.xlu0 %v363
        %v365 = vpop.xlane.xlu0 %364
        %v366 = vadd.f32 %v344, %v362
        %v367 = vadd.f32 %v345, %v365
        %368 = vst.msk [vmem:[#allocation4] sm:$0xff] %vm330, %v366
        %369 = vst.msk [vmem:[#allocation4 + $0x8] sm:$0xff] %vm330, %v367
        // Predicated region
        $region41: #{tpu_custom_call.1} parent=31 // pred_check
          %p370 = pneg %p249
        $region42: #{tpu_custom_call.1} parent=31 // pred_check_branch
          %372 = sbr.rel (%p370) target = $region44
        $region43: #{tpu_custom_call.1} parent=31 // pred_region
          %v373 = vld [vmem:[#allocation2] sm:$0xff]
          %v374 = vld [vmem:[#allocation2 + $0x8] sm:$0xff]
          %v375 = vld [vmem:[#allocation3] sm:$0xff]
          %v376 = vld [vmem:[#allocation3 + $0x8] sm:$0xff]
          %v377 = vlog2.pop %v375
          %v378 = vmul.f32 %v377, 0.6931472
          %v379 = vlog2.pop %v376
          %v380 = vmul.f32 %v379, 0.6931472
          %v381 = vadd.f32 %v373, %v378
          %v382 = vadd.f32 %v374, %v380
          %v383 = vld [vmem:[#allocation4] sm:$0xff]
          %v384 = vld [vmem:[#allocation4 + $0x8] sm:$0xff]
          %v385 = vsub.f32 %v381, %v383
          %v386 = vsub.f32 %v382, %v384
          %s387 = smul.u32 %s24, 16
          %v388 = vlaneseq
          %v389 = vshrl.u32 %v388, 7
          %v390 = vadd.s32 %v389, 8
          %v391 = vstv %s387
          %v392 = vadd.s32 %v391, %v389
          %v393 = vadd.s32 %v391, %v390
          %vm394 = vcmp.lt.s32.totalorder %v392, 20
          %vm395 = vcmp.lt.s32.totalorder %v393, 20
          %v396 = vsel %vm394, %v385, 0.0
          %v397 = vsel %vm395, %v386, 0.0
          %v398 = vsel %vm330, %v396, 0.0
          %v399 = vsel %vm330, %v397, 0.0
          %v400 = vadd.f32 %v398, %v399
          %401 = vadd.xlane.f32.xlu0 %v400
          %v402 = vpop.xlane.xlu0 %401
          %v403 = vrot.slane %v402, 4
          %v404 = vadd.f32 %v402, %v403
          %v405 = vrot.slane %v404, 2
          %v406 = vadd.f32 %v404, %v405
          %v407 = vrot.slane %v406, 1
          %v408 = vadd.f32 %v406, %v407
          %s409 = vtos %v408
          %vm410 = vcmp.eq.s32.totalorder %v389, 0
          %vm411 = vcmp.eq.s32.totalorder %v342, 0
          %vm412 = vmand %vm410, %vm411
          %v413 = vstv %s409
          %v414 = vsel %vm412, %v413, 0.0
          %415 = vst [vmem:[%s235] sm:$0xff] %v414
        $region44: #{tpu_custom_call.1} parent=31 // pred_fallthru
          _
        %s416 = sand.u32 %s120, 1
        %s417 = scalar_lea.sflag [#allocation7], %s416
        %s418 = sand.u32 %s120, 1
        %s419 = smul.addr %s418, 8
        %s420 = scalar_lea.vmem [#allocation8], %s419
        // Predicated region
        $region45: #{tpu_custom_call.1} parent=31 // pred_check
          %p421 = pneg %p130
        $region46: #{tpu_custom_call.1} parent=31 // pred_check_branch
          %423 = sbr.rel (%p421) target = $region48
        $region47: #{tpu_custom_call.1} parent=31 // pred_region
          %s425 = ssub.s32 128, 128
          %426 = vsyncadd %s417, %s425
          %s427 = smul.addr %s24, 128
          %s428 = scalar_lea.hbm %s3, %s427
          %s430 = sshll.u32 %s420, 4
          %s431 = int_to_ptr.vmem [resolvable:$true] %s430
          %433 = dma.vmem_to_hbm [thread:$0]  %s431, 128, %s428, %s417
        $region48: #{tpu_custom_call.1} parent=31 // pred_fallthru
          _
      $region32: #{tpu_custom_call.1} parent=5 // pred_fallthru
        _
      %p434 = scmp.le.s32.totalorder 2, %s15
      // Predicated region
      $region49: #{tpu_custom_call.1} parent=5 // pred_check
        %p435 = pneg %p434
      $region50: #{tpu_custom_call.1} parent=5 // pred_check_branch
        %437 = sbr.rel (%p435) target = $region52
      $region51: #{tpu_custom_call.1} parent=5 // pred_region
        %s438 = ssub.s32 %s15, 2
        // Predicated region
        $region53: #{tpu_custom_call.1} parent=51 // pred_check
          %p439 = pneg %p136
        $region54: #{tpu_custom_call.1} parent=51 // pred_check_branch
          %441 = sbr.rel (%p439) target = $region56
        $region55: #{tpu_custom_call.1} parent=51 // pred_region
          %s442 = sand.u32 %s121, 1
          %s443 = scalar_lea.sflag [#allocation7], %s442
          %s444 = sand.u32 %s121, 1
          %s445 = smul.addr %s444, 8
          %s446 = scalar_lea.vmem [#allocation8], %s445
          %447 = dma.done %s443, 128
        $region56: #{tpu_custom_call.1} parent=51 // pred_fallthru
          _
      $region52: #{tpu_custom_call.1} parent=5 // pred_fallthru
        _
    $region6: #{tpu_custom_call.1} parent=1 // loop_footer
      %s19 = sadd.s32 1, %s15
    $region7: #{tpu_custom_call.1} parent=1 // loop_footer_branch
      %14 = sbr.rel target = $region3
    $region8: #{tpu_custom_call.1} parent=1 // loop_exit
      _
    %448 = vsyncpa [#allocation6], 1
    %s449 = scalar_lea.sflag [#allocation6], 1
    %450 = vsyncpa %s449, 1
    %451 = vsyncpa [#allocation7], 1
    %s452 = scalar_lea.sflag [#allocation7], 1
    %453 = vsyncpa %s452, 1

</llo_original>
